<compile_context>
chip_gen: v7x
topology: tpu7x:2x2x1
jax: 0.10.0
libtpu: 0.0.40
codegen_flags: <defaults>
</compile_context>

<pallas_src>
import jax
import jax.numpy as jnp
from jax.experimental import pallas as pl
from jax.experimental.pallas import tpu as pltpu


def generator_mlp_kernel(x_ref, n_ref, w1x_ref, w1n_ref, b1_ref,
                         w2_ref, b2_ref, w3_ref, b3_ref, w4_ref, b4_ref,
                         ot_ref):
    """One batch tile of the fused 4-layer MLP. Weights are VMEM-resident."""
    neg_slope = jnp.float32(0.01)  # nn.LeakyReLU() default

    x = x_ref[...].astype(jnp.float32)       # [tb, dx]
    n = n_ref[...].astype(jnp.float32)       # [tb, dn]

    # Linear(22, 40) with the concat folded into two matmuls (no wrapper concat).
    z1 = (jnp.dot(x, w1x_ref[...], preferred_element_type=jnp.float32)
          + jnp.dot(n, w1n_ref[...], preferred_element_type=jnp.float32)
          + b1_ref[...])
    # TODO(synk): nn.Dropout(0.2) — identity at inference; stochastic train-mode
    # dropout (pltpu.prng_random_bits mask) intentionally not applied.

    # Linear(40, 80) + LeakyReLU
    z2 = jnp.dot(z1, w2_ref[...], preferred_element_type=jnp.float32) + b2_ref[...]
    a2 = jnp.where(z2 > 0, z2, neg_slope * z2)
    # TODO(synk): second nn.Dropout(0.2) — identity at inference.

    # Linear(80, 80) + LeakyReLU
    z3 = jnp.dot(a2, w3_ref[...], preferred_element_type=jnp.float32) + b3_ref[...]
    a3 = jnp.where(z3 > 0, z3, neg_slope * z3)

    # Linear(80, 2)
    z4 = jnp.dot(a3, w4_ref[...], preferred_element_type=jnp.float32) + b4_ref[...]

    # Lane-dense store: write the [2, tb] transpose so the output's last dim is
    # the batch tile (>=128 when gridded) instead of 2 masked lanes.
    ot_ref[...] = z4.T.astype(ot_ref.dtype)


def init_generator_params(key):
    """PyTorch-default-style uniform(-1/sqrt(fan_in), 1/sqrt(fan_in)).
    Weights stored [in, out]; biases stored [1, out]."""
    dims = [(22, 40), (40, 80), (80, 80), (80, 2)]
    params = []
    for fan_in, fan_out in dims:
        key, kw, kb = jax.random.split(key, 3)
        bound = 1.0 / jnp.sqrt(jnp.float32(fan_in))
        w = jax.random.uniform(kw, (fan_in, fan_out), jnp.float32, -bound, bound)
        b = jax.random.uniform(kb, (1, fan_out), jnp.float32, -bound, bound)
        params.append((w, b))
    return params


def generator_forward(x, noise, params, *, tile_b=2048):
    """x: [B, dx], noise: [B, dn] with dx + dn == 22. Returns [B, 2]."""
    B, dx = x.shape
    Bn, dn = noise.shape
    assert B == Bn and dx + dn == 22, (x.shape, noise.shape)

    (w1, b1), (w2, b2), (w3, b3), (w4, b4) = params
    # Fold torch.cat((x, noise), dim=1) into the first matmul: split w1 by rows.
    w1x, w1n = w1[:dx], w1[dx:]

    # Batch tile: full array when small, otherwise a (8,128)-friendly tile so
    # Pallas can double-buffer the batch stream while weights stay resident.
    tb = B if B <= tile_b else tile_b
    grid = (pl.cdiv(B, tb),)

    batch_map = lambda i: (i, 0)
    resident = lambda i: (0, 0)   # same block every step -> fetched once, VMEM-resident

    in_specs = [
        pl.BlockSpec((tb, dx), batch_map),
        pl.BlockSpec((tb, dn), batch_map),
        pl.BlockSpec(w1x.shape, resident),
        pl.BlockSpec(w1n.shape, resident),
        pl.BlockSpec(b1.shape, resident),
        pl.BlockSpec(w2.shape, resident),
        pl.BlockSpec(b2.shape, resident),
        pl.BlockSpec(w3.shape, resident),
        pl.BlockSpec(b3.shape, resident),
        pl.BlockSpec(w4.shape, resident),
        pl.BlockSpec(b4.shape, resident),
    ]
    out_spec = pl.BlockSpec((2, tb), lambda i: (0, i))

    flops = 2 * B * (22 * 40 + 40 * 80 + 80 * 80 + 80 * 2)
    weight_bytes = 4 * sum(w.size + b.size for (w, b) in params)
    bytes_accessed = 4 * B * (dx + dn + 2) + weight_bytes

    out_t = pl.pallas_call(
        generator_mlp_kernel,
        out_shape=jax.ShapeDtypeStruct((2, B), jnp.float32),
        grid=grid,
        in_specs=in_specs,
        out_specs=out_spec,
        compiler_params=pltpu.CompilerParams(
            dimension_semantics=("parallel",)),  # 2-TC sharding on v7x; no-op elsewhere
        cost_estimate=pl.CostEstimate(
            flops=flops, transcendentals=0, bytes_accessed=bytes_accessed),
    )(x, noise, w1x, w1n, b1, w2, b2, w3, b3, w4, b4)

    # Cheap wrapper transpose back to the PyTorch layout [B, 2].
    return out_t.T


def generator_forward_ref(x, noise, params):
    """Pure-JAX reference for correctness checking (inference semantics)."""
    h = jnp.concatenate([x, noise], axis=1).astype(jnp.float32)
    (w1, b1), (w2, b2), (w3, b3), (w4, b4) = params
    z = h @ w1 + b1
    z = z @ w2 + b2
    z = jnp.where(z > 0, z, 0.01 * z)
    z = z @ w3 + b3
    z = jnp.where(z > 0, z, 0.01 * z)
    return z @ w4 + b4


if __name__ == "__main__":
    key = jax.random.PRNGKey(0)
    k_params, k_x, k_noise = jax.random.split(key, 3)
    params = init_generator_params(k_params)

    # Small single-block case (B=8, grid of 1).
    B = 8
    x = jax.random.normal(k_x, (B, 20), jnp.float32)          # conditioning input
    noise = jax.random.normal(k_noise, (B, 2), jnp.float32)   # latent noise (20+2=22)
    out = jax.block_until_ready(generator_forward(x, noise, params))
    ref = generator_forward_ref(x, noise, params)
    assert out.shape == (B, 2), out.shape
    assert jnp.allclose(out, ref, atol=1e-4, rtol=1e-4), "mismatch vs ref (B=8)"

    # Gridded case exercising batch tiling + resident weights (grid=(2,)).
    B2 = 256
    x2 = jax.random.normal(k_x, (B2, 20), jnp.float32)
    noise2 = jax.random.normal(k_noise, (B2, 2), jnp.float32)
    out2 = jax.block_until_ready(generator_forward(x2, noise2, params, tile_b=128))
    ref2 = generator_forward_ref(x2, noise2, params)
    assert out2.shape == (B2, 2), out2.shape
    assert jnp.allclose(out2, ref2, atol=1e-4, rtol=1e-4), "mismatch vs ref (tiled)"

    print("KERNEL_OK")
</pallas_src>

<mosaic_0001>
module attributes {stable_mosaic.version = 11 : i64} {
  func.func @generator_mlp_kernel(%arg0: i32, %arg1: memref<8x20xf32, #tpu.memory_space<vmem>>, %arg2: memref<8x2xf32, #tpu.memory_space<vmem>>, %arg3: memref<20x40xf32, #tpu.memory_space<vmem>>, %arg4: memref<2x40xf32, #tpu.memory_space<vmem>>, %arg5: memref<1x40xf32, #tpu.memory_space<vmem>>, %arg6: memref<40x80xf32, #tpu.memory_space<vmem>>, %arg7: memref<1x80xf32, #tpu.memory_space<vmem>>, %arg8: memref<80x80xf32, #tpu.memory_space<vmem>>, %arg9: memref<1x80xf32, #tpu.memory_space<vmem>>, %arg10: memref<80x2xf32, #tpu.memory_space<vmem>>, %arg11: memref<1x2xf32, #tpu.memory_space<vmem>>, %arg12: memref<2x8xf32, #tpu.memory_space<vmem>>) attributes {dimension_semantics = [#tpu.dimension_semantics<parallel>], iteration_bounds = array<i64: 1>, scalar_prefetch = 0 : i64, scratch_operands = 0 : i64, tpu.core_type = #tpu.core_type<tc>, window_params = [{transform_indices = @transform_0, window_bounds = array<i64: 8, 20>}, {transform_indices = @transform_1, window_bounds = array<i64: 8, 2>}, {pipeline_mode = #tpu.pipeline_mode<synchronous>, transform_indices = @transform_2, window_bounds = array<i64: 20, 40>}, {pipeline_mode = #tpu.pipeline_mode<synchronous>, transform_indices = @transform_3, window_bounds = array<i64: 2, 40>}, {pipeline_mode = #tpu.pipeline_mode<synchronous>, transform_indices = @transform_4, window_bounds = array<i64: 1, 40>}, {pipeline_mode = #tpu.pipeline_mode<synchronous>, transform_indices = @transform_5, window_bounds = array<i64: 40, 80>}, {pipeline_mode = #tpu.pipeline_mode<synchronous>, transform_indices = @transform_6, window_bounds = array<i64: 1, 80>}, {pipeline_mode = #tpu.pipeline_mode<synchronous>, transform_indices = @transform_7, window_bounds = array<i64: 80, 80>}, {pipeline_mode = #tpu.pipeline_mode<synchronous>, transform_indices = @transform_8, window_bounds = array<i64: 1, 80>}, {pipeline_mode = #tpu.pipeline_mode<synchronous>, transform_indices = @transform_9, window_bounds = array<i64: 80, 2>}, {pipeline_mode = #tpu.pipeline_mode<synchronous>, transform_indices = @transform_10, window_bounds = array<i64: 1, 2>}, {transform_indices = @transform_11, window_bounds = array<i64: 2, 8>}]} {
    %c0 = arith.constant 0 : index
    %c0_0 = arith.constant 0 : index
    %0 = vector.load %arg1[%c0, %c0_0] : memref<8x20xf32, #tpu.memory_space<vmem>>, vector<8x20xf32>
    %c0_1 = arith.constant 0 : index
    %c0_2 = arith.constant 0 : index
    %1 = vector.load %arg2[%c0_1, %c0_2] : memref<8x2xf32, #tpu.memory_space<vmem>>, vector<8x2xf32>
    %c0_3 = arith.constant 0 : index
    %c0_4 = arith.constant 0 : index
    %2 = vector.load %arg3[%c0_3, %c0_4] : memref<20x40xf32, #tpu.memory_space<vmem>>, vector<20x40xf32>
    %cst = arith.constant dense<0.000000e+00> : vector<8x40xf32>
    %3 = tpu.matmul %0, %2, %cst {dimension_numbers = #tpu.dot_dimension_numbers<[1], [0], [0], [1], [0, 0, 1, 1], [], []>} : vector<8x20xf32>, vector<20x40xf32>, vector<8x40xf32> -> vector<8x40xf32>
    %c0_5 = arith.constant 0 : index
    %c0_6 = arith.constant 0 : index
    %4 = vector.load %arg4[%c0_5, %c0_6] : memref<2x40xf32, #tpu.memory_space<vmem>>, vector<2x40xf32>
    %cst_7 = arith.constant dense<0.000000e+00> : vector<8x40xf32>
    %5 = tpu.matmul %1, %4, %cst_7 {dimension_numbers = #tpu.dot_dimension_numbers<[1], [0], [0], [1], [0, 0, 1, 1], [], []>} : vector<8x2xf32>, vector<2x40xf32>, vector<8x40xf32> -> vector<8x40xf32>
    %6 = arith.addf %3, %5 : vector<8x40xf32>
    %c0_8 = arith.constant 0 : index
    %c0_9 = arith.constant 0 : index
    %7 = vector.load %arg5[%c0_8, %c0_9] : memref<1x40xf32, #tpu.memory_space<vmem>>, vector<1x40xf32>
    %8 = vector.broadcast %7 : vector<1x40xf32> to vector<8x40xf32>
    %9 = arith.addf %6, %8 : vector<8x40xf32>
    %c0_10 = arith.constant 0 : index
    %c0_11 = arith.constant 0 : index
    %10 = vector.load %arg6[%c0_10, %c0_11] : memref<40x80xf32, #tpu.memory_space<vmem>>, vector<40x80xf32>
    %cst_12 = arith.constant dense<0.000000e+00> : vector<8x80xf32>
    %11 = tpu.matmul %9, %10, %cst_12 {dimension_numbers = #tpu.dot_dimension_numbers<[1], [0], [0], [1], [0, 0, 1, 1], [], []>} : vector<8x40xf32>, vector<40x80xf32>, vector<8x80xf32> -> vector<8x80xf32>
    %c0_13 = arith.constant 0 : index
    %c0_14 = arith.constant 0 : index
    %12 = vector.load %arg7[%c0_13, %c0_14] : memref<1x80xf32, #tpu.memory_space<vmem>>, vector<1x80xf32>
    %13 = vector.broadcast %12 : vector<1x80xf32> to vector<8x80xf32>
    %14 = arith.addf %11, %13 : vector<8x80xf32>
    %cst_15 = arith.constant 0.000000e+00 : f32
    %15 = vector.broadcast %cst_15 : f32 to vector<8x80xf32>
    %16 = arith.cmpf ogt, %14, %15 : vector<8x80xf32>
    %cst_16 = arith.constant 0.00999999977 : f32
    %17 = vector.broadcast %cst_16 : f32 to vector<8x80xf32>
    %18 = arith.mulf %17, %14 : vector<8x80xf32>
    %19 = arith.select %16, %14, %18 : vector<8x80xi1>, vector<8x80xf32>
    %c0_17 = arith.constant 0 : index
    %c0_18 = arith.constant 0 : index
    %20 = vector.load %arg8[%c0_17, %c0_18] : memref<80x80xf32, #tpu.memory_space<vmem>>, vector<80x80xf32>
    %cst_19 = arith.constant dense<0.000000e+00> : vector<8x80xf32>
    %21 = tpu.matmul %19, %20, %cst_19 {dimension_numbers = #tpu.dot_dimension_numbers<[1], [0], [0], [1], [0, 0, 1, 1], [], []>} : vector<8x80xf32>, vector<80x80xf32>, vector<8x80xf32> -> vector<8x80xf32>
    %c0_20 = arith.constant 0 : index
    %c0_21 = arith.constant 0 : index
    %22 = vector.load %arg9[%c0_20, %c0_21] : memref<1x80xf32, #tpu.memory_space<vmem>>, vector<1x80xf32>
    %23 = vector.broadcast %22 : vector<1x80xf32> to vector<8x80xf32>
    %24 = arith.addf %21, %23 : vector<8x80xf32>
    %cst_22 = arith.constant 0.000000e+00 : f32
    %25 = vector.broadcast %cst_22 : f32 to vector<8x80xf32>
    %26 = arith.cmpf ogt, %24, %25 : vector<8x80xf32>
    %cst_23 = arith.constant 0.00999999977 : f32
    %27 = vector.broadcast %cst_23 : f32 to vector<8x80xf32>
    %28 = arith.mulf %27, %24 : vector<8x80xf32>
    %29 = arith.select %26, %24, %28 : vector<8x80xi1>, vector<8x80xf32>
    %c0_24 = arith.constant 0 : index
    %c0_25 = arith.constant 0 : index
    %30 = vector.load %arg10[%c0_24, %c0_25] : memref<80x2xf32, #tpu.memory_space<vmem>>, vector<80x2xf32>
    %cst_26 = arith.constant dense<0.000000e+00> : vector<8x2xf32>
    %31 = tpu.matmul %29, %30, %cst_26 {dimension_numbers = #tpu.dot_dimension_numbers<[1], [0], [0], [1], [0, 0, 1, 1], [], []>} : vector<8x80xf32>, vector<80x2xf32>, vector<8x2xf32> -> vector<8x2xf32>
    %c0_27 = arith.constant 0 : index
    %c0_28 = arith.constant 0 : index
    %32 = vector.load %arg11[%c0_27, %c0_28] : memref<1x2xf32, #tpu.memory_space<vmem>>, vector<1x2xf32>
    %33 = vector.broadcast %32 : vector<1x2xf32> to vector<8x2xf32>
    %34 = arith.addf %31, %33 : vector<8x2xf32>
    %35 = tpu.transpose %34, [1, 0] : vector<8x2xf32> -> vector<2x8xf32>
    %c0_29 = arith.constant 0 : index
    %c0_30 = arith.constant 0 : index
    %36 = vector.load %arg12[%c0_29, %c0_30] : memref<2x8xf32, #tpu.memory_space<vmem>>, vector<2x8xf32>
    tpu.vector_store %arg12[%c0_29, %c0_30], %35 {strides = array<i32>} : memref<2x8xf32, #tpu.memory_space<vmem>>, vector<2x8xf32>,
    return
  }
  func.func @transform_0(%arg0: i32) -> (i32, i32) {
    %c0_i32 = arith.constant 0 : i32
    %c0_i32_0 = arith.constant 0 : i32
    return %arg0, %c0_i32 : i32, i32
  }
  func.func @transform_1(%arg0: i32) -> (i32, i32) {
    %c0_i32 = arith.constant 0 : i32
    %c0_i32_0 = arith.constant 0 : i32
    return %arg0, %c0_i32 : i32, i32
  }
  func.func @transform_2(%arg0: i32) -> (i32, i32) {
    %c0_i32 = arith.constant 0 : i32
    %c0_i32_0 = arith.constant 0 : i32
    %c0_i32_1 = arith.constant 0 : i32
    return %c0_i32, %c0_i32_0 : i32, i32
  }
  func.func @transform_3(%arg0: i32) -> (i32, i32) {
    %c0_i32 = arith.constant 0 : i32
    %c0_i32_0 = arith.constant 0 : i32
    %c0_i32_1 = arith.constant 0 : i32
    return %c0_i32, %c0_i32_0 : i32, i32
  }
  func.func @transform_4(%arg0: i32) -> (i32, i32) {
    %c0_i32 = arith.constant 0 : i32
    %c0_i32_0 = arith.constant 0 : i32
    %c0_i32_1 = arith.constant 0 : i32
    return %c0_i32, %c0_i32_0 : i32, i32
  }
  func.func @transform_5(%arg0: i32) -> (i32, i32) {
    %c0_i32 = arith.constant 0 : i32
    %c0_i32_0 = arith.constant 0 : i32
    %c0_i32_1 = arith.constant 0 : i32
    return %c0_i32, %c0_i32_0 : i32, i32
  }
  func.func @transform_6(%arg0: i32) -> (i32, i32) {
    %c0_i32 = arith.constant 0 : i32
    %c0_i32_0 = arith.constant 0 : i32
    %c0_i32_1 = arith.constant 0 : i32
    return %c0_i32, %c0_i32_0 : i32, i32
  }
  func.func @transform_7(%arg0: i32) -> (i32, i32) {
    %c0_i32 = arith.constant 0 : i32
    %c0_i32_0 = arith.constant 0 : i32
    %c0_i32_1 = arith.constant 0 : i32
    return %c0_i32, %c0_i32_0 : i32, i32
  }
  func.func @transform_8(%arg0: i32) -> (i32, i32) {
    %c0_i32 = arith.constant 0 : i32
    %c0_i32_0 = arith.constant 0 : i32
    %c0_i32_1 = arith.constant 0 : i32
    return %c0_i32, %c0_i32_0 : i32, i32
  }
  func.func @transform_9(%arg0: i32) -> (i32, i32) {
    %c0_i32 = arith.constant 0 : i32
    %c0_i32_0 = arith.constant 0 : i32
    %c0_i32_1 = arith.constant 0 : i32
    return %c0_i32, %c0_i32_0 : i32, i32
  }
  func.func @transform_10(%arg0: i32) -> (i32, i32) {
    %c0_i32 = arith.constant 0 : i32
    %c0_i32_0 = arith.constant 0 : i32
    %c0_i32_1 = arith.constant 0 : i32
    return %c0_i32, %c0_i32_0 : i32, i32
  }
  func.func @transform_11(%arg0: i32) -> (i32, i32) {
    %c0_i32 = arith.constant 0 : i32
    %c0_i32_0 = arith.constant 0 : i32
    return %c0_i32, %arg0 : i32, i32
  }
}

</mosaic_0001>

<llo_original>
// kernel: tpu_custom_call.1
$region0: #{tpu_custom_call.1}
  #allocation0 [shape = 'u32[]', space=smem, size = 0x4, offset = 0x4, fixed_abs, tag = 'smem constant byte address 0x4 - core index']
  #allocation1 [shape = 'u32[144,128]{1,0:T(1,128)}', space=vmem, size = 0x12000, scoped, tag = 'internal scratch']
  %s0 = inlined_call_operand.vmem [shape: f32[8,20], index: 0, kind: input, shape index: {}]
  %s1 = inlined_call_operand.vmem [shape: f32[8,2], index: 1, kind: input, shape index: {}]
  %s2 = inlined_call_operand.vmem [shape: f32[20,40], index: 2, kind: input, shape index: {}]
  %s3 = inlined_call_operand.vmem [shape: f32[2,40], index: 3, kind: input, shape index: {}]
  %s4 = inlined_call_operand.vmem [shape: f32[1,40], index: 4, kind: input, shape index: {}]
  %s5 = inlined_call_operand.hbm [shape: f32[40,80], index: 5, kind: input, shape index: {}]
  %s6 = inlined_call_operand.vmem [shape: f32[1,80], index: 6, kind: input, shape index: {}]
  %s7 = inlined_call_operand.vmem [shape: f32[80,80], index: 7, kind: input, shape index: {}]
  %s8 = inlined_call_operand.vmem [shape: f32[1,80], index: 8, kind: input, shape index: {}]
  %s9 = inlined_call_operand.vmem [shape: f32[80,2], index: 9, kind: input, shape index: {}]
  %s10 = inlined_call_operand.vmem [shape: f32[1,2], index: 10, kind: input, shape index: {}]
  %s11 = inlined_call_operand.hbm [shape: f32[2,8], index: 11, kind: output, shape index: {}]
  %s12 = sld [smem:[#allocation0]]
  $region58: #{tpu_custom_call.1} parent=0
    _
  %s14 = ssub.s32 1, %s12
  %s15 = scalar_select 0, %s14, %s12
  $region1: #{tpu_custom_call.1} parent=0
    #allocation2 [shape = 'u8[20480]{0}', space=vmem, size = 0x5000, scoped, tag = 'input window, operand 5, single buffered']
    #allocation3 [shape = 's32[1]{0}', space=sflag, size = 0x4, scoped, tag = 'scoped memory for tpu_custom_call.1']
    #allocation4 [shape = 's32[1]{0}', space=sflag, size = 0x4, scoped, tag = 'scoped memory for tpu_custom_call.1']
    #allocation5 [shape = 'u8[1024]{0}', space=vmem, size = 0x400, scoped, tag = 'output window, operand 0, single buffered']
    %16 = vsyncpa [#allocation3], 0
    %17 = vsyncpa [#allocation4], 0
    // Predicated region
    $region2: #{tpu_custom_call.1} parent=1 // pred_check
      _
    $region3: #{tpu_custom_call.1} parent=1 // pred_check_branch
      %19 = sbr.rel (0) target = $region5
    $region4: #{tpu_custom_call.1} parent=1 // pred_region
      _
    $region5: #{tpu_custom_call.1} parent=1 // pred_fallthru
      _
    // Predicated region
    $region6: #{tpu_custom_call.1} parent=1 // pred_check
      _
    $region7: #{tpu_custom_call.1} parent=1 // pred_check_branch
      %21 = sbr.rel (0) target = $region9
    $region8: #{tpu_custom_call.1} parent=1 // pred_region
      _
    $region9: #{tpu_custom_call.1} parent=1 // pred_fallthru
      _
    // Predicated region
    $region10: #{tpu_custom_call.1} parent=1 // pred_check
      _
    $region11: #{tpu_custom_call.1} parent=1 // pred_check_branch
      %23 = sbr.rel (0) target = $region13
    $region12: #{tpu_custom_call.1} parent=1 // pred_region
      _
    $region13: #{tpu_custom_call.1} parent=1 // pred_fallthru
      _
    // Predicated region
    $region14: #{tpu_custom_call.1} parent=1 // pred_check
      _
    $region15: #{tpu_custom_call.1} parent=1 // pred_check_branch
      %25 = sbr.rel (0) target = $region17
    $region16: #{tpu_custom_call.1} parent=1 // pred_region
      _
    $region17: #{tpu_custom_call.1} parent=1 // pred_fallthru
      _
    // Predicated region
    $region18: #{tpu_custom_call.1} parent=1 // pred_check
      _
    $region19: #{tpu_custom_call.1} parent=1 // pred_check_branch
      %27 = sbr.rel (0) target = $region21
    $region20: #{tpu_custom_call.1} parent=1 // pred_region
      _
    $region21: #{tpu_custom_call.1} parent=1 // pred_fallthru
      _
    // Predicated region
    $region22: #{tpu_custom_call.1} parent=1 // pred_check
      _
    $region23: #{tpu_custom_call.1} parent=1 // pred_check_branch
      %29 = sbr.rel (0) target = $region25
    $region24: #{tpu_custom_call.1} parent=1 // pred_region
      %s31 = ssub.s32 640, 640
      %32 = vsyncadd [#allocation3], %s31
      %s33 = sshll.u32 [#allocation2], 4
      %s34 = int_to_ptr.vmem [resolvable:$true] %s33
      %39 = dma.hbm_to_vmem [thread:$0]  %s5, 640, %s34, [#allocation3], 128, 128, 8
    $region25: #{tpu_custom_call.1} parent=1 // pred_fallthru
      _
    // Predicated region
    $region26: #{tpu_custom_call.1} parent=1 // pred_check
      _
    $region27: #{tpu_custom_call.1} parent=1 // pred_check_branch
      %41 = sbr.rel (0) target = $region29
    $region28: #{tpu_custom_call.1} parent=1 // pred_region
      _
    $region29: #{tpu_custom_call.1} parent=1 // pred_fallthru
      _
    // Predicated region
    $region30: #{tpu_custom_call.1} parent=1 // pred_check
      _
    $region31: #{tpu_custom_call.1} parent=1 // pred_check_branch
      %43 = sbr.rel (0) target = $region33
    $region32: #{tpu_custom_call.1} parent=1 // pred_region
      _
    $region33: #{tpu_custom_call.1} parent=1 // pred_fallthru
      _
    // Predicated region
    $region34: #{tpu_custom_call.1} parent=1 // pred_check
      _
    $region35: #{tpu_custom_call.1} parent=1 // pred_check_branch
      %45 = sbr.rel (0) target = $region37
    $region36: #{tpu_custom_call.1} parent=1 // pred_region
      _
    $region37: #{tpu_custom_call.1} parent=1 // pred_fallthru
      _
    // Predicated region
    $region38: #{tpu_custom_call.1} parent=1 // pred_check
      _
    $region39: #{tpu_custom_call.1} parent=1 // pred_check_branch
      %47 = sbr.rel (0) target = $region41
    $region40: #{tpu_custom_call.1} parent=1 // pred_region
      _
    $region41: #{tpu_custom_call.1} parent=1 // pred_fallthru
      _
    // Predicated region
    $region42: #{tpu_custom_call.1} parent=1 // pred_check
      _
    $region43: #{tpu_custom_call.1} parent=1 // pred_check_branch
      %49 = sbr.rel (0) target = $region45
    $region44: #{tpu_custom_call.1} parent=1 // pred_region
      _
    $region45: #{tpu_custom_call.1} parent=1 // pred_fallthru
      _
    // Predicated region
    $region46: #{tpu_custom_call.1} parent=1 // pred_check
      _
    $region47: #{tpu_custom_call.1} parent=1 // pred_check_branch
      %51 = sbr.rel (0) target = $region49
    $region48: #{tpu_custom_call.1} parent=1 // pred_region
      %52 = dma.done [#allocation3], 640
    $region49: #{tpu_custom_call.1} parent=1 // pred_fallthru
      _
    %v53 = vld [vmem:[%s0] sm:$0xff]
    %v54 = vld [vmem:[%s1] sm:$0xff]
    %v55 = vld [vmem:[%s2] sm:$0xff]
    %v56 = vld [vmem:[%s2 + $0x8] sm:$0xff]
    %v57 = vld [vmem:[%s2 + $0x10] sm:$0xf]
    %v58 = vld [vmem:[%s3] sm:$0x3]
    %vm59 = vcmask 15360
    %v61 = vsel %vm59, %v54, 0
    %vm63 = vcmask 1041408
    %v65 = vsel %vm63, %v58, 0
    %67 = vmatprep.subr.mxu0 0.0
    %68 = vmatpush1.msra.mxu0 %v65
    %69 = vmatprep.subr.mxu0 0.0
    %70 = vmatpush1.msra.mxu0 0.0
    %71 = vmatprep.subr.mxu0 0.0
    %72 = vmatpush1.msra.mxu0 0.0
    %73 = vmatprep.subr.mxu0 0.0
    %74 = vmatpush1.msra.mxu0 0.0
    %75 = vmatprep.subr.mxu0 0.0
    %76 = vmatpush1.msra.mxu0 0.0
    %77 = vmatprep.subr.mxu0 0.0
    %78 = vmatpush1.msra.mxu0 0.0
    %79 = vmatprep.subr.mxu0 0.0
    %80 = vmatpush1.msra.mxu0 0.0
    %81 = vmatprep.subr.mxu0 0.0
    %82 = vmatpush1.msra.mxu0 0.0
    %83 = vmatprep.subr.mxu0 0.0
    %84 = vmatpush1.msra.mxu0 0.0
    %85 = vmatprep.subr.mxu0 0.0
    %86 = vmatpush1.msra.mxu0 0.0
    %87 = vmatprep.subr.mxu0 0.0
    %88 = vmatpush1.msra.mxu0 0.0
    %89 = vmatprep.subr.mxu0 0.0
    %90 = vmatpush1.msra.mxu0 0.0
    %91 = vmatprep.subr.mxu0 0.0
    %92 = vmatpush1.msra.mxu0 0.0
    %93 = vmatprep.subr.mxu0 0.0
    %94 = vmatpush1.msra.mxu0 0.0
    %95 = vmatprep.subr.mxu0 0.0
    %96 = vmatpush1.msra.mxu0 0.0
    %97 = vmatprep.subr.mxu0 0.0
    %98 = vmatpush1.msra.mxu0 0.0
    %99 = vmatprep.subr.mxu0 0.0
    %100 = vmatpush1.msra.mxu0 0.0
    %101 = vmatprep.subr.mxu0 0.0
    %102 = vmatpush1.msra.mxu0 0.0
    %103 = vmatprep.subr.mxu0 0.0
    %104 = vmatpush1.msra.mxu0 0.0
    %105 = vmatprep.subr.mxu0 0.0
    %106 = vmatpush1.msra.mxu0 0.0
    %107 = vmatprep.subr.mxu0 0.0
    %108 = vmatpush1.msra.mxu0 0.0
    %109 = vmatprep.subr.mxu0 0.0
    %110 = vmatpush1.msra.mxu0 0.0
    %111 = vmatprep.subr.mxu0 0.0
    %112 = vmatpush1.msra.mxu0 0.0
    %113 = vmatprep.subr.mxu0 0.0
    %114 = vmatpush1.msra.mxu0 0.0
    %115 = vmatprep.subr.mxu0 0.0
    %116 = vmatpush1.msra.mxu0 0.0
    %117 = vmatprep.subr.mxu0 0.0
    %118 = vmatpush1.msra.mxu0 0.0
    %119 = vmatprep.subr.mxu0 0.0
    %120 = vmatpush1.msra.mxu0 0.0
    %121 = vmatprep.subr.mxu0 0.0
    %122 = vmatpush1.msra.mxu0 0.0
    %123 = vmatprep.subr.mxu0 0.0
    %124 = vmatpush1.msra.mxu0 0.0
    %125 = vmatprep.subr.mxu0 0.0
    %126 = vmatpush1.msra.mxu0 0.0
    %127 = vmatprep.subr.mxu0 0.0
    %128 = vmatpush1.msra.mxu0 0.0
    %129 = vmatprep.subr.mxu0 0.0
    %130 = vmatpush1.msra.mxu0 0.0
    %131 = vmatprep.mubr.f32.mxu0 0.0
    %132 = vmatmul.mubr.f32.gmra.mrb[0].mxu0 %v61
    %v133 = vpop.f32.mrb[0].mxu0
    %v134 = vadd.f32 0.0, %v133
    %v135 = vpop.f32.mrb[0].mxu0
    %136 = vdwg.mxu0
    %vm137 = vcmask 162816
    %v139 = vsel %vm137, %v53, 0
    %vm141 = vcmask 1043456
    %v143 = vsel %vm141, %v57, 0
    %145 = vmatprep.subr.mxu0 0.0
    %146 = vmatpush1.msra.mxu0 %v55
    %147 = vmatprep.subr.mxu0 0.0
    %148 = vmatpush1.msra.mxu0 %v56
    %149 = vmatprep.subr.mxu0 0.0
    %150 = vmatpush1.msra.mxu0 %v143
    %151 = vmatprep.subr.mxu0 0.0
    %152 = vmatpush1.msra.mxu0 0.0
    %153 = vmatprep.subr.mxu0 0.0
    %154 = vmatpush1.msra.mxu0 0.0
    %155 = vmatprep.subr.mxu0 0.0
    %156 = vmatpush1.msra.mxu0 0.0
    %157 = vmatprep.subr.mxu0 0.0
    %158 = vmatpush1.msra.mxu0 0.0
    %159 = vmatprep.subr.mxu0 0.0
    %160 = vmatpush1.msra.mxu0 0.0
    %161 = vmatprep.subr.mxu0 0.0
    %162 = vmatpush1.msra.mxu0 0.0
    %163 = vmatprep.subr.mxu0 0.0
    %164 = vmatpush1.msra.mxu0 0.0
    %165 = vmatprep.subr.mxu0 0.0
    %166 = vmatpush1.msra.mxu0 0.0
    %167 = vmatprep.subr.mxu0 0.0
    %168 = vmatpush1.msra.mxu0 0.0
    %169 = vmatprep.subr.mxu0 0.0
    %170 = vmatpush1.msra.mxu0 0.0
    %171 = vmatprep.subr.mxu0 0.0
    %172 = vmatpush1.msra.mxu0 0.0
    %173 = vmatprep.subr.mxu0 0.0
    %174 = vmatpush1.msra.mxu0 0.0
    %175 = vmatprep.subr.mxu0 0.0
    %176 = vmatpush1.msra.mxu0 0.0
    %177 = vmatprep.subr.mxu0 0.0
    %178 = vmatpush1.msra.mxu0 0.0
    %179 = vmatprep.subr.mxu0 0.0
    %180 = vmatpush1.msra.mxu0 0.0
    %181 = vmatprep.subr.mxu0 0.0
    %182 = vmatpush1.msra.mxu0 0.0
    %183 = vmatprep.subr.mxu0 0.0
    %184 = vmatpush1.msra.mxu0 0.0
    %185 = vmatprep.subr.mxu0 0.0
    %186 = vmatpush1.msra.mxu0 0.0
    %187 = vmatprep.subr.mxu0 0.0
    %188 = vmatpush1.msra.mxu0 0.0
    %189 = vmatprep.subr.mxu0 0.0
    %190 = vmatpush1.msra.mxu0 0.0
    %191 = vmatprep.subr.mxu0 0.0
    %192 = vmatpush1.msra.mxu0 0.0
    %193 = vmatprep.subr.mxu0 0.0
    %194 = vmatpush1.msra.mxu0 0.0
    %195 = vmatprep.subr.mxu0 0.0
    %196 = vmatpush1.msra.mxu0 0.0
    %197 = vmatprep.subr.mxu0 0.0
    %198 = vmatpush1.msra.mxu0 0.0
    %199 = vmatprep.subr.mxu0 0.0
    %200 = vmatpush1.msra.mxu0 0.0
    %201 = vmatprep.subr.mxu0 0.0
    %202 = vmatpush1.msra.mxu0 0.0
    %203 = vmatprep.subr.mxu0 0.0
    %204 = vmatpush1.msra.mxu0 0.0
    %205 = vmatprep.subr.mxu0 0.0
    %206 = vmatpush1.msra.mxu0 0.0
    %207 = vmatprep.subr.mxu0 0.0
    %208 = vmatpush1.msra.mxu0 0.0
    %209 = vmatprep.mubr.f32.mxu0 0.0
    %210 = vmatmul.mubr.f32.gmra.mrb[0].mxu0 %v139
    %v211 = vpop.f32.mrb[0].mxu0
    %v212 = vadd.f32 %v134, %v211
    %v213 = vpop.f32.mrb[0].mxu0
    %214 = vdwg.mxu0
    %v215 = vld [vmem:[%s4] sm:$0x1]
    %v217 = vlaneseq
    %v218 = vshrl.u32 %v217, 7
    %v219 = vsub.s32 0, %v218
    %v220 = vrot.slane %v215, %v219
    %v222 = vadd.f32 %v212, %v220
    %v223 = vld [vmem:[#allocation2] sm:$0xff]
    %v224 = vld [vmem:[#allocation2 + $0x8] sm:$0xff]
    %v225 = vld [vmem:[#allocation2 + $0x10] sm:$0xff]
    %v226 = vld [vmem:[#allocation2 + $0x18] sm:$0xff]
    %v227 = vld [vmem:[#allocation2 + $0x20] sm:$0xff]
    %v228 = vld [vmem:[%s6] sm:$0x1]
    %v230 = vlaneseq
    %v231 = vshrl.u32 %v230, 7
    %v232 = vsub.s32 0, %v231
    %v233 = vrot.slane %v228, %v232
    %vm235 = vcmask 326656
    %v237 = vsel %vm235, %v222, 0
    %239 = vmatprep.subr.mxu0 0.0
    %240 = vmatpush1.msra.mxu0 %v223
    %241 = vmatprep.subr.mxu0 0.0
    %242 = vmatpush1.msra.mxu0 %v224
    %243 = vmatprep.subr.mxu0 0.0
    %244 = vmatpush1.msra.mxu0 %v225
    %245 = vmatprep.subr.mxu0 0.0
    %246 = vmatpush1.msra.mxu0 %v226
    %247 = vmatprep.subr.mxu0 0.0
    %248 = vmatpush1.msra.mxu0 %v227
    %249 = vmatprep.subr.mxu0 0.0
    %250 = vmatpush1.msra.mxu0 0.0
    %251 = vmatprep.subr.mxu0 0.0
    %252 = vmatpush1.msra.mxu0 0.0
    %253 = vmatprep.subr.mxu0 0.0
    %254 = vmatpush1.msra.mxu0 0.0
    %255 = vmatprep.subr.mxu0 0.0
    %256 = vmatpush1.msra.mxu0 0.0
    %257 = vmatprep.subr.mxu0 0.0
    %258 = vmatpush1.msra.mxu0 0.0
    %259 = vmatprep.subr.mxu0 0.0
    %260 = vmatpush1.msra.mxu0 0.0
    %261 = vmatprep.subr.mxu0 0.0
    %262 = vmatpush1.msra.mxu0 0.0
    %263 = vmatprep.subr.mxu0 0.0
    %264 = vmatpush1.msra.mxu0 0.0
    %265 = vmatprep.subr.mxu0 0.0
    %266 = vmatpush1.msra.mxu0 0.0
    %267 = vmatprep.subr.mxu0 0.0
    %268 = vmatpush1.msra.mxu0 0.0
    %269 = vmatprep.subr.mxu0 0.0
    %270 = vmatpush1.msra.mxu0 0.0
    %271 = vmatprep.subr.mxu0 0.0
    %272 = vmatpush1.msra.mxu0 0.0
    %273 = vmatprep.subr.mxu0 0.0
    %274 = vmatpush1.msra.mxu0 0.0
    %275 = vmatprep.subr.mxu0 0.0
    %276 = vmatpush1.msra.mxu0 0.0
    %277 = vmatprep.subr.mxu0 0.0
    %278 = vmatpush1.msra.mxu0 0.0
    %279 = vmatprep.subr.mxu0 0.0
    %280 = vmatpush1.msra.mxu0 0.0
    %281 = vmatprep.subr.mxu0 0.0
    %282 = vmatpush1.msra.mxu0 0.0
    %283 = vmatprep.subr.mxu0 0.0
    %284 = vmatpush1.msra.mxu0 0.0
    %285 = vmatprep.subr.mxu0 0.0
    %286 = vmatpush1.msra.mxu0 0.0
    %287 = vmatprep.subr.mxu0 0.0
    %288 = vmatpush1.msra.mxu0 0.0
    %289 = vmatprep.subr.mxu0 0.0
    %290 = vmatpush1.msra.mxu0 0.0
    %291 = vmatprep.subr.mxu0 0.0
    %292 = vmatpush1.msra.mxu0 0.0
    %293 = vmatprep.subr.mxu0 0.0
    %294 = vmatpush1.msra.mxu0 0.0
    %295 = vmatprep.subr.mxu0 0.0
    %296 = vmatpush1.msra.mxu0 0.0
    %297 = vmatprep.subr.mxu0 0.0
    %298 = vmatpush1.msra.mxu0 0.0
    %299 = vmatprep.subr.mxu0 0.0
    %300 = vmatpush1.msra.mxu0 0.0
    %301 = vmatprep.subr.mxu0 0.0
    %302 = vmatpush1.msra.mxu0 0.0
    %303 = vmatprep.mubr.f32.mxu0 0.0
    %304 = vmatmul.mubr.f32.gmra.mrb[0].mxu0 %v237
    %v305 = vpop.f32.mrb[0].mxu0
    %v306 = vadd.f32 %v233, %v305
    %v307 = vpop.f32.mrb[0].mxu0
    %308 = vdwg.mxu0
    %vm309 = vcmp.gt.f32.partialorder %v306, 0.0
    %v310 = vmul.f32 %v306, 0.01
    %v311 = vsel %vm309, %v306, %v310
    %v312 = vld [vmem:[%s7] sm:$0xff]
    %v313 = vld [vmem:[%s7 + $0x8] sm:$0xff]
    %v314 = vld [vmem:[%s7 + $0x10] sm:$0xff]
    %v315 = vld [vmem:[%s7 + $0x18] sm:$0xff]
    %v316 = vld [vmem:[%s7 + $0x20] sm:$0xff]
    %v317 = vld [vmem:[%s7 + $0x28] sm:$0xff]
    %v318 = vld [vmem:[%s7 + $0x30] sm:$0xff]
    %v319 = vld [vmem:[%s7 + $0x38] sm:$0xff]
    %v320 = vld [vmem:[%s7 + $0x40] sm:$0xff]
    %v321 = vld [vmem:[%s7 + $0x48] sm:$0xff]
    %v322 = vld [vmem:[%s8] sm:$0x1]
    %v324 = vlaneseq
    %v325 = vshrl.u32 %v324, 7
    %v326 = vsub.s32 0, %v325
    %v327 = vrot.slane %v322, %v326
    %vm329 = vcmask 654336
    %v331 = vsel %vm329, %v311, 0
    %333 = vmatprep.subr.mxu0 0.0
    %334 = vmatpush1.msra.mxu0 %v312
    %335 = vmatprep.subr.mxu0 0.0
    %336 = vmatpush1.msra.mxu0 %v313
    %337 = vmatprep.subr.mxu0 0.0
    %338 = vmatpush1.msra.mxu0 %v314
    %339 = vmatprep.subr.mxu0 0.0
    %340 = vmatpush1.msra.mxu0 %v315
    %341 = vmatprep.subr.mxu0 0.0
    %342 = vmatpush1.msra.mxu0 %v316
    %343 = vmatprep.subr.mxu0 0.0
    %344 = vmatpush1.msra.mxu0 %v317
    %345 = vmatprep.subr.mxu0 0.0
    %346 = vmatpush1.msra.mxu0 %v318
    %347 = vmatprep.subr.mxu0 0.0
    %348 = vmatpush1.msra.mxu0 %v319
    %349 = vmatprep.subr.mxu0 0.0
    %350 = vmatpush1.msra.mxu0 %v320
    %351 = vmatprep.subr.mxu0 0.0
    %352 = vmatpush1.msra.mxu0 %v321
    %353 = vmatprep.subr.mxu0 0.0
    %354 = vmatpush1.msra.mxu0 0.0
    %355 = vmatprep.subr.mxu0 0.0
    %356 = vmatpush1.msra.mxu0 0.0
    %357 = vmatprep.subr.mxu0 0.0
    %358 = vmatpush1.msra.mxu0 0.0
    %359 = vmatprep.subr.mxu0 0.0
    %360 = vmatpush1.msra.mxu0 0.0
    %361 = vmatprep.subr.mxu0 0.0
    %362 = vmatpush1.msra.mxu0 0.0
    %363 = vmatprep.subr.mxu0 0.0
    %364 = vmatpush1.msra.mxu0 0.0
    %365 = vmatprep.subr.mxu0 0.0
    %366 = vmatpush1.msra.mxu0 0.0
    %367 = vmatprep.subr.mxu0 0.0
    %368 = vmatpush1.msra.mxu0 0.0
    %369 = vmatprep.subr.mxu0 0.0
    %370 = vmatpush1.msra.mxu0 0.0
    %371 = vmatprep.subr.mxu0 0.0
    %372 = vmatpush1.msra.mxu0 0.0
    %373 = vmatprep.subr.mxu0 0.0
    %374 = vmatpush1.msra.mxu0 0.0
    %375 = vmatprep.subr.mxu0 0.0
    %376 = vmatpush1.msra.mxu0 0.0
    %377 = vmatprep.subr.mxu0 0.0
    %378 = vmatpush1.msra.mxu0 0.0
    %379 = vmatprep.subr.mxu0 0.0
    %380 = vmatpush1.msra.mxu0 0.0
    %381 = vmatprep.subr.mxu0 0.0
    %382 = vmatpush1.msra.mxu0 0.0
    %383 = vmatprep.subr.mxu0 0.0
    %384 = vmatpush1.msra.mxu0 0.0
    %385 = vmatprep.subr.mxu0 0.0
    %386 = vmatpush1.msra.mxu0 0.0
    %387 = vmatprep.subr.mxu0 0.0
    %388 = vmatpush1.msra.mxu0 0.0
    %389 = vmatprep.subr.mxu0 0.0
    %390 = vmatpush1.msra.mxu0 0.0
    %391 = vmatprep.subr.mxu0 0.0
    %392 = vmatpush1.msra.mxu0 0.0
    %393 = vmatprep.subr.mxu0 0.0
    %394 = vmatpush1.msra.mxu0 0.0
    %395 = vmatprep.subr.mxu0 0.0
    %396 = vmatpush1.msra.mxu0 0.0
    %397 = vmatprep.mubr.f32.mxu0 0.0
    %398 = vmatmul.mubr.f32.gmra.mrb[0].mxu0 %v331
    %v399 = vpop.f32.mrb[0].mxu0
    %v400 = vadd.f32 %v327, %v399
    %v401 = vpop.f32.mrb[0].mxu0
    %402 = vdwg.mxu0
    %vm403 = vcmp.gt.f32.partialorder %v400, 0.0
    %v404 = vmul.f32 %v400, 0.01
    %v405 = vsel %vm403, %v400, %v404
    %v406 = vld [vmem:[%s9] sm:$0xff]
    %v407 = vld [vmem:[%s9 + $0x8] sm:$0xff]
    %v408 = vld [vmem:[%s9 + $0x10] sm:$0xff]
    %v409 = vld [vmem:[%s9 + $0x18] sm:$0xff]
    %v410 = vld [vmem:[%s9 + $0x20] sm:$0xff]
    %v411 = vld [vmem:[%s9 + $0x28] sm:$0xff]
    %v412 = vld [vmem:[%s9 + $0x30] sm:$0xff]
    %v413 = vld [vmem:[%s9 + $0x38] sm:$0xff]
    %v414 = vld [vmem:[%s9 + $0x40] sm:$0xff]
    %v415 = vld [vmem:[%s9 + $0x48] sm:$0xff]
    %v416 = vld [vmem:[%s10] sm:$0x1]
    %v418 = vlaneseq
    %v419 = vshrl.u32 %v418, 7
    %v420 = vsub.s32 0, %v419
    %v421 = vrot.slane %v416, %v420
    %v424 = vsel %vm329, %v405, 0
    %426 = vmatprep.subr.mxu0 0.0
    %427 = vmatpush1.msra.mxu0 %v406
    %428 = vmatprep.subr.mxu0 0.0
    %429 = vmatpush1.msra.mxu0 %v407
    %430 = vmatprep.subr.mxu0 0.0
    %431 = vmatpush1.msra.mxu0 %v408
    %432 = vmatprep.subr.mxu0 0.0
    %433 = vmatpush1.msra.mxu0 %v409
    %434 = vmatprep.subr.mxu0 0.0
    %435 = vmatpush1.msra.mxu0 %v410
    %436 = vmatprep.subr.mxu0 0.0
    %437 = vmatpush1.msra.mxu0 %v411
    %438 = vmatprep.subr.mxu0 0.0
    %439 = vmatpush1.msra.mxu0 %v412
    %440 = vmatprep.subr.mxu0 0.0
    %441 = vmatpush1.msra.mxu0 %v413
    %442 = vmatprep.subr.mxu0 0.0
    %443 = vmatpush1.msra.mxu0 %v414
    %444 = vmatprep.subr.mxu0 0.0
    %445 = vmatpush1.msra.mxu0 %v415
    %446 = vmatprep.subr.mxu0 0.0
    %447 = vmatpush1.msra.mxu0 0.0
    %448 = vmatprep.subr.mxu0 0.0
    %449 = vmatpush1.msra.mxu0 0.0
    %450 = vmatprep.subr.mxu0 0.0
    %451 = vmatpush1.msra.mxu0 0.0
    %452 = vmatprep.subr.mxu0 0.0
    %453 = vmatpush1.msra.mxu0 0.0
    %454 = vmatprep.subr.mxu0 0.0
    %455 = vmatpush1.msra.mxu0 0.0
    %456 = vmatprep.subr.mxu0 0.0
    %457 = vmatpush1.msra.mxu0 0.0
    %458 = vmatprep.subr.mxu0 0.0
    %459 = vmatpush1.msra.mxu0 0.0
    %460 = vmatprep.subr.mxu0 0.0
    %461 = vmatpush1.msra.mxu0 0.0
    %462 = vmatprep.subr.mxu0 0.0
    %463 = vmatpush1.msra.mxu0 0.0
    %464 = vmatprep.subr.mxu0 0.0
    %465 = vmatpush1.msra.mxu0 0.0
    %466 = vmatprep.subr.mxu0 0.0
    %467 = vmatpush1.msra.mxu0 0.0
    %468 = vmatprep.subr.mxu0 0.0
    %469 = vmatpush1.msra.mxu0 0.0
    %470 = vmatprep.subr.mxu0 0.0
    %471 = vmatpush1.msra.mxu0 0.0
    %472 = vmatprep.subr.mxu0 0.0
    %473 = vmatpush1.msra.mxu0 0.0
    %474 = vmatprep.subr.mxu0 0.0
    %475 = vmatpush1.msra.mxu0 0.0
    %476 = vmatprep.subr.mxu0 0.0
    %477 = vmatpush1.msra.mxu0 0.0
    %478 = vmatprep.subr.mxu0 0.0
    %479 = vmatpush1.msra.mxu0 0.0
    %480 = vmatprep.subr.mxu0 0.0
    %481 = vmatpush1.msra.mxu0 0.0
    %482 = vmatprep.subr.mxu0 0.0
    %483 = vmatpush1.msra.mxu0 0.0
    %484 = vmatprep.subr.mxu0 0.0
    %485 = vmatpush1.msra.mxu0 0.0
    %486 = vmatprep.subr.mxu0 0.0
    %487 = vmatpush1.msra.mxu0 0.0
    %488 = vmatprep.subr.mxu0 0.0
    %489 = vmatpush1.msra.mxu0 0.0
    %490 = vmatprep.mubr.f32.mxu0 0.0
    %491 = vmatmul.mubr.f32.gmra.mrb[0].mxu0 %v424
    %v492 = vpop.f32.mrb[0].mxu0
    %v493 = vadd.f32 %v421, %v492
    %v494 = vpop.f32.mrb[0].mxu0
    %495 = vdwg.mxu0
    %496 = vxpose.xlu0.b32.start [1/16] %v493, 128
    %497 = vxpose.xlu0.b32.cont [2/16] 0.0, 128
    %498 = vxpose.xlu0.b32.cont [3/16] 0.0, 128
    %499 = vxpose.xlu0.b32.cont [4/16] 0.0, 128
    %500 = vxpose.xlu0.b32.cont [5/16] 0.0, 128
    %501 = vxpose.xlu0.b32.cont [6/16] 0.0, 128
    %502 = vxpose.xlu0.b32.cont [7/16] 0.0, 128
    %503 = vxpose.xlu0.b32.cont [8/16] 0.0, 128
    %504 = vxpose.xlu0.b32.cont [9/16] 0.0, 128
    %505 = vxpose.xlu0.b32.cont [10/16] 0.0, 128
    %506 = vxpose.xlu0.b32.cont [11/16] 0.0, 128
    %507 = vxpose.xlu0.b32.cont [12/16] 0.0, 128
    %508 = vxpose.xlu0.b32.cont [13/16] 0.0, 128
    %509 = vxpose.xlu0.b32.cont [14/16] 0.0, 128
    %510 = vxpose.xlu0.b32.cont [15/16] 0.0, 128
    %511 = vxpose.xlu0.b32.end [16/16] 0.0, 128
    %v512 = vpop.trf.xlu0
    %v513 = vpop.trf.xlu0
    %v514 = vpop.trf.xlu0
    %v515 = vpop.trf.xlu0
    %v516 = vpop.trf.xlu0
    %v517 = vpop.trf.xlu0
    %v518 = vpop.trf.xlu0
    %v519 = vpop.trf.xlu0
    %v520 = vpop.trf.xlu0
    %v521 = vpop.trf.xlu0
    %v522 = vpop.trf.xlu0
    %v523 = vpop.trf.xlu0
    %v524 = vpop.trf.xlu0
    %v525 = vpop.trf.xlu0
    %v526 = vpop.trf.xlu0
    %v527 = vpop.trf.xlu0
    %vm528 = vcmask 58368
    %529 = vst.msk [vmem:[#allocation5] sm:$0x3] %vm528, %v512
    // Predicated region
    $region50: #{tpu_custom_call.1} parent=1 // pred_check
      _
    $region51: #{tpu_custom_call.1} parent=1 // pred_check_branch
      %531 = sbr.rel (0) target = $region53
    $region52: #{tpu_custom_call.1} parent=1 // pred_region
      %s533 = ssub.s32 32, 32
      %534 = vsyncadd [#allocation4], %s533
      %s536 = sshll.u32 [#allocation5], 4
      %s537 = int_to_ptr.vmem [resolvable:$true] %s536
      %539 = dma.vmem_to_hbm [thread:$0]  %s537, 32, %s11, [#allocation4]
    $region53: #{tpu_custom_call.1} parent=1 // pred_fallthru
      _
    // Predicated region
    $region54: #{tpu_custom_call.1} parent=1 // pred_check
      _
    $region55: #{tpu_custom_call.1} parent=1 // pred_check_branch
      %541 = sbr.rel (0) target = $region57
    $region56: #{tpu_custom_call.1} parent=1 // pred_region
      %542 = dma.done [#allocation4], 32
    $region57: #{tpu_custom_call.1} parent=1 // pred_fallthru
      _
    %543 = vsyncpa [#allocation3], 1
    %544 = vsyncpa [#allocation4], 1

</llo_original>
